<compile_context>
chip_gen: v7x
topology: tpu7x:2x2x1
jax: 0.10.0
libtpu: 0.0.40
codegen_flags: <defaults>
</compile_context>

<pallas_src>
import jax
import jax.numpy as jnp
from jax.experimental import pallas as pl
from jax.experimental.pallas import tpu as pltpu

NUM_VIEWS = 4

_ROW_TILE_CAP = 1024
_TARGET_ELEMS_PER_BLOCK = 512 * 1024   # ~2 MiB f32 per view block per grid step
_VMEM_LIMIT_BYTES = 48 * 1024 * 1024   # < v7x 64 MiB physical, > v5e 16 MiB default scoped


def _views_fusion_kernel(x0_ref, x1_ref, x2_ref, x3_ref, pids_ref,
                         feat_ref, pids_out_ref):
    """x{v}_ref: [TB, TD] lane-dense view blocks, pids_ref: [TB, 4] int32."""
    # Same add order as the PyTorch loop: f[4i] + f[4i+1] + f[4i+2] + f[4i+3].
    fused = x0_ref[...] + x1_ref[...] + x2_ref[...] + x3_ref[...]
    feat_ref[...] = fused.astype(feat_ref.dtype)

    # The pids output block is revisited across column tiles j; write it once
    # per row tile (that grid axis is marked "arbitrary").
    @pl.when(pl.program_id(1) == 0)
    def _():
        pids_out_ref[...] = pids_ref[:, 0:1]


def _round_up(x, m):
    return ((x + m - 1) // m) * m


def _pick_col_tile(dim_p):
    """Largest lane-dense (multiple-of-128) tile dividing dim_p, capped at 2048."""
    for cand in (2048, 1024, 512, 384, 256, 128):
        if dim_p % cand == 0:
            return cand
    return 128  # unreachable: dim_p is a multiple of 128


def _pick_row_tile(chunk_bs, td):
    """Multiple-of-8 row tile giving ~2 MiB per view block per grid step."""
    tb = (_TARGET_ELEMS_PER_BLOCK // max(td, 1)) // 8 * 8
    tb = max(8, min(_ROW_TILE_CAP, tb))
    tb = min(tb, _round_up(chunk_bs, 8))
    # Keep >= 2 tiles on the "parallel" row axis when the batch allows it, so
    # v7x's two TensorCores can both stream HBM.
    if chunk_bs <= tb and chunk_bs > 16:
        tb = _round_up(-(-chunk_bs // 2), 8)
    return max(8, tb)


def _make_view_spec(tb, td, view, col_blocks_per_view):
    def idx(i, j):
        return (i, view * col_blocks_per_view + j)
    return pl.BlockSpec((tb, td), idx)


def feature_views_fusion(features, pids):
    """features: [bs, dim] float, pids: [bs] int -> ([bs//4, dim], [bs//4] int32)."""
    bs, dim = features.shape
    assert bs % NUM_VIEWS == 0, "batch must be a multiple of num_views=4"
    chunk_bs = bs // NUM_VIEWS

    # Pad the feature dim up to a lane-width multiple (128) if needed so every
    # view block is lane-dense; edge case only, padded columns sliced off below.
    dim_p = _round_up(dim, 128)
    feats = features if dim_p == dim else jnp.pad(features, ((0, 0), (0, dim_p - dim)))

    # Free contiguous reshape: row i of `flat` = [f[4i] | f[4i+1] | f[4i+2] | f[4i+3]].
    flat = feats.reshape(chunk_bs, NUM_VIEWS * dim_p)
    pids2 = pids.astype(jnp.int32).reshape(chunk_bs, NUM_VIEWS)

    td = _pick_col_tile(dim_p)
    tb = _pick_row_tile(chunk_bs, td)
    col_blocks_per_view = dim_p // td
    grid = (pl.cdiv(chunk_bs, tb), col_blocks_per_view)

    fused, fused_pids = pl.pallas_call(
        _views_fusion_kernel,
        out_shape=(
            jax.ShapeDtypeStruct((chunk_bs, dim_p), features.dtype),
            jax.ShapeDtypeStruct((chunk_bs, 1), jnp.int32),
        ),
        grid_spec=pltpu.PrefetchScalarGridSpec(
            num_scalar_prefetch=0,
            grid=grid,
            in_specs=[
                _make_view_spec(tb, td, 0, col_blocks_per_view),
                _make_view_spec(tb, td, 1, col_blocks_per_view),
                _make_view_spec(tb, td, 2, col_blocks_per_view),
                _make_view_spec(tb, td, 3, col_blocks_per_view),
                pl.BlockSpec((tb, NUM_VIEWS), lambda i, j: (i, 0)),
            ],
            out_specs=(
                pl.BlockSpec((tb, td), lambda i, j: (i, j)),
                pl.BlockSpec((tb, 1), lambda i, j: (i, 0)),
            ),
        ),
        compiler_params=pltpu.CompilerParams(
            # Row tiles are independent -> megacore-shardable on v7x; column
            # tiles revisit the pids output block -> "arbitrary".
            dimension_semantics=("parallel", "arbitrary"),
            vmem_limit_bytes=_VMEM_LIMIT_BYTES,
        ),
        cost_estimate=pl.CostEstimate(
            flops=3 * chunk_bs * dim,
            transcendentals=0,
            bytes_accessed=(bs * dim + chunk_bs * dim) * 4 + bs * 4 + chunk_bs * 4,
        ),
    )(flat, flat, flat, flat, pids2)

    if dim_p != dim:
        fused = fused[:, :dim]
    return fused, fused_pids.reshape(chunk_bs)


def _reference(features, pids):
    """Pure-JAX reference mirroring the PyTorch loop."""
    bs, dim = features.shape
    chunk_bs = bs // NUM_VIEWS
    x3 = features.reshape(chunk_bs, NUM_VIEWS, dim)
    fused = x3[:, 0, :] + x3[:, 1, :] + x3[:, 2, :] + x3[:, 3, :]
    fused_pids = pids.astype(jnp.int32).reshape(chunk_bs, NUM_VIEWS)[:, 0]
    return fused, fused_pids


if __name__ == "__main__":
    key = jax.random.PRNGKey(0)

    # (bs, dim): small shapes consistent with the module (bs = 4 * chunk_bs).
    test_shapes = [
        (8, 256),    # tiny: single tile, masked rows (chunk_bs=2 < tb=8)
        (96, 384),   # chunk_bs=24 -> two "parallel" row tiles + ragged last tile
        (16, 200),   # dim not a multiple of 128 -> lane-padding path
    ]
    for bs, dim in test_shapes:
        key, k_feat, k_pid = jax.random.split(key, 3)
        features = jax.random.normal(k_feat, (bs, dim), jnp.float32)
        pids = jax.random.randint(k_pid, (bs,), 0, 1000, jnp.int32)

        fused, fused_pids = jax.block_until_ready(
            feature_views_fusion(features, pids))

        r_fused, r_pids = _reference(features, pids)
        assert fused.shape == (bs // NUM_VIEWS, dim), (bs, dim)
        assert fused_pids.shape == (bs // NUM_VIEWS,), (bs, dim)
        assert fused_pids.dtype == jnp.int32
        assert jnp.allclose(fused, r_fused, atol=1e-5, rtol=1e-5), (bs, dim)
        assert jnp.array_equal(fused_pids, r_pids), (bs, dim)

    print("KERNEL_OK")
</pallas_src>

<mosaic_0001>
module attributes {stable_mosaic.version = 11 : i64} {
  func.func @_views_fusion_kernel(%arg0: i32, %arg1: i32, %arg2: memref<8x256xf32, #tpu.memory_space<vmem>>, %arg3: memref<8x256xf32, #tpu.memory_space<vmem>>, %arg4: memref<8x256xf32, #tpu.memory_space<vmem>>, %arg5: memref<8x256xf32, #tpu.memory_space<vmem>>, %arg6: memref<8x4xi32, #tpu.memory_space<vmem>>, %arg7: memref<8x256xf32, #tpu.memory_space<vmem>>, %arg8: memref<8x1xi32, #tpu.memory_space<vmem>>) attributes {dimension_semantics = [#tpu.dimension_semantics<parallel>, #tpu.dimension_semantics<arbitrary>], iteration_bounds = array<i64: 1, 1>, scalar_prefetch = 0 : i64, scratch_operands = 0 : i64, tpu.core_type = #tpu.core_type<tc>, window_params = [{transform_indices = @transform_0, window_bounds = array<i64: 8, 256>}, {transform_indices = @transform_1, window_bounds = array<i64: 8, 256>}, {transform_indices = @transform_2, window_bounds = array<i64: 8, 256>}, {transform_indices = @transform_3, window_bounds = array<i64: 8, 256>}, {transform_indices = @transform_4, window_bounds = array<i64: 8, 4>}, {transform_indices = @transform_5, window_bounds = array<i64: 8, 256>}, {transform_indices = @transform_6, window_bounds = array<i64: 8, 1>}]} {
    %c0 = arith.constant 0 : index
    %c0_0 = arith.constant 0 : index
    %0 = vector.load %arg2[%c0, %c0_0] : memref<8x256xf32, #tpu.memory_space<vmem>>, vector<8x256xf32>
    %c0_1 = arith.constant 0 : index
    %c0_2 = arith.constant 0 : index
    %1 = vector.load %arg3[%c0_1, %c0_2] : memref<8x256xf32, #tpu.memory_space<vmem>>, vector<8x256xf32>
    %2 = arith.addf %0, %1 : vector<8x256xf32>
    %c0_3 = arith.constant 0 : index
    %c0_4 = arith.constant 0 : index
    %3 = vector.load %arg4[%c0_3, %c0_4] : memref<8x256xf32, #tpu.memory_space<vmem>>, vector<8x256xf32>
    %4 = arith.addf %2, %3 : vector<8x256xf32>
    %c0_5 = arith.constant 0 : index
    %c0_6 = arith.constant 0 : index
    %5 = vector.load %arg5[%c0_5, %c0_6] : memref<8x256xf32, #tpu.memory_space<vmem>>, vector<8x256xf32>
    %6 = arith.addf %4, %5 : vector<8x256xf32>
    %c0_7 = arith.constant 0 : index
    %c0_8 = arith.constant 0 : index
    %7 = vector.load %arg7[%c0_7, %c0_8] : memref<8x256xf32, #tpu.memory_space<vmem>>, vector<8x256xf32>
    tpu.vector_store %arg7[%c0_7, %c0_8], %6 {strides = array<i32>} : memref<8x256xf32, #tpu.memory_space<vmem>>, vector<8x256xf32>,
    %c0_i32 = arith.constant 0 : i32
    %8 = arith.cmpi eq, %arg1, %c0_i32 : i32
    %9 = arith.extui %8 : i1 to i32
    %c0_i32_9 = arith.constant 0 : i32
    %10 = arith.cmpi ne, %9, %c0_i32_9 : i32
    scf.if %10 {
      %c0_10 = arith.constant 0 : index
      %c0_11 = arith.constant 0 : index
      %11 = vector.load %arg6[%c0_10, %c0_11] : memref<8x4xi32, #tpu.memory_space<vmem>>, vector<8x1xi32>
      %c0_12 = arith.constant 0 : index
      %c0_13 = arith.constant 0 : index
      %12 = vector.load %arg8[%c0_12, %c0_13] : memref<8x1xi32, #tpu.memory_space<vmem>>, vector<8x1xi32>
      tpu.vector_store %arg8[%c0_12, %c0_13], %11 {strides = array<i32>} : memref<8x1xi32, #tpu.memory_space<vmem>>, vector<8x1xi32>,
    } else {
    }
    return
  }
  func.func @transform_0(%arg0: i32, %arg1: i32) -> (i32, i32) {
    %c0_i32 = arith.constant 0 : i32
    %0 = arith.addi %c0_i32, %arg1 : i32
    %c0_i32_0 = arith.constant 0 : i32
    return %arg0, %0 : i32, i32
  }
  func.func @transform_1(%arg0: i32, %arg1: i32) -> (i32, i32) {
    %c1_i32 = arith.constant 1 : i32
    %0 = arith.addi %c1_i32, %arg1 : i32
    %c0_i32 = arith.constant 0 : i32
    return %arg0, %0 : i32, i32
  }
  func.func @transform_2(%arg0: i32, %arg1: i32) -> (i32, i32) {
    %c2_i32 = arith.constant 2 : i32
    %0 = arith.addi %c2_i32, %arg1 : i32
    %c0_i32 = arith.constant 0 : i32
    return %arg0, %0 : i32, i32
  }
  func.func @transform_3(%arg0: i32, %arg1: i32) -> (i32, i32) {
    %c3_i32 = arith.constant 3 : i32
    %0 = arith.addi %c3_i32, %arg1 : i32
    %c0_i32 = arith.constant 0 : i32
    return %arg0, %0 : i32, i32
  }
  func.func @transform_4(%arg0: i32, %arg1: i32) -> (i32, i32) {
    %c0_i32 = arith.constant 0 : i32
    %c0_i32_0 = arith.constant 0 : i32
    return %arg0, %c0_i32 : i32, i32
  }
  func.func @transform_5(%arg0: i32, %arg1: i32) -> (i32, i32) {
    %c0_i32 = arith.constant 0 : i32
    return %arg0, %arg1 : i32, i32
  }
  func.func @transform_6(%arg0: i32, %arg1: i32) -> (i32, i32) {
    %c0_i32 = arith.constant 0 : i32
    %c0_i32_0 = arith.constant 0 : i32
    return %arg0, %c0_i32 : i32, i32
  }
}

</mosaic_0001>

<llo_original>
// kernel: tpu_custom_call.1
$region0: #{tpu_custom_call.1}
  #allocation0 [shape = 'u32[]', space=smem, size = 0x4, offset = 0x4, fixed_abs, tag = 'smem constant byte address 0x4 - core index']
  #allocation1 [shape = 'u32[144,128]{1,0:T(1,128)}', space=vmem, size = 0x12000, scoped, tag = 'internal scratch']
  %s0 = inlined_call_operand.hbm [shape: f32[2,1024], index: 0, kind: input, shape index: {}]
  %s1 = inlined_call_operand.hbm [shape: f32[2,1024], index: 1, kind: input, shape index: {}]
  %s2 = inlined_call_operand.hbm [shape: f32[2,1024], index: 2, kind: input, shape index: {}]
  %s3 = inlined_call_operand.hbm [shape: f32[2,1024], index: 3, kind: input, shape index: {}]
  %s4 = inlined_call_operand.vmem [shape: s32[2,4], index: 4, kind: input, shape index: {}]
  %s5 = inlined_call_operand.hbm [shape: f32[2,256], index: 5, kind: output, shape index: {0}]
  %s6 = inlined_call_operand.vmem [shape: s32[2,1], index: 6, kind: output, shape index: {1}]
  %7 = xla_tuple %s5, %s6
  %s8 = sld [smem:[#allocation0]]
  $region88: #{tpu_custom_call.1} parent=0
    _
  %s10 = ssub.s32 1, %s8
  %s11 = scalar_select 0, %s10, %s8
  $region1: #{tpu_custom_call.1} parent=0
    #allocation2 [shape = 'u8[8192]{0}', space=vmem, size = 0x2000, scoped, tag = 'input window, operand 0, single buffered']
    #allocation3 [shape = 's32[1]{0}', space=sflag, size = 0x4, scoped, tag = 'scoped memory for tpu_custom_call.1']
    #allocation4 [shape = 's32[1]{0}', space=sflag, size = 0x4, scoped, tag = 'scoped memory for tpu_custom_call.1']
    #allocation5 [shape = 'u8[8192]{0}', space=vmem, size = 0x2000, scoped, tag = 'input window, operand 1, single buffered']
    #allocation6 [shape = 's32[1]{0}', space=sflag, size = 0x4, scoped, tag = 'scoped memory for tpu_custom_call.1']
    #allocation7 [shape = 'u8[8192]{0}', space=vmem, size = 0x2000, scoped, tag = 'input window, operand 2, single buffered']
    #allocation8 [shape = 'u8[8192]{0}', space=vmem, size = 0x2000, scoped, tag = 'input window, operand 3, single buffered']
    #allocation9 [shape = 's32[1]{0}', space=sflag, size = 0x4, scoped, tag = 'scoped memory for tpu_custom_call.1']
    #allocation10 [shape = 'u8[8192]{0}', space=vmem, size = 0x2000, scoped, tag = 'output window, operand 0, single buffered']
    #allocation11 [shape = 'u8[4096]{0}', space=vmem, size = 0x1000, scoped, tag = 'output window, operand 1, single buffered']
    %12 = vsyncpa [#allocation3], 0
    %13 = vsyncpa [#allocation6], 0
    %14 = vsyncpa [#allocation9], 0
    %15 = vsyncpa [#allocation4], 0
    // Predicated region
    $region2: #{tpu_custom_call.1} parent=1 // pred_check
      _
    $region3: #{tpu_custom_call.1} parent=1 // pred_check_branch
      %17 = sbr.rel (0) target = $region5
    $region4: #{tpu_custom_call.1} parent=1 // pred_region
      %s19 = ssub.s32 256, 64
      %20 = vsyncadd [#allocation3], %s19
      %s21 = sshll.u32 [#allocation2], 4
      %s22 = int_to_ptr.vmem [resolvable:$true] %s21
      %27 = dma.hbm_to_vmem [thread:$0]  %s0, 64, %s22, [#allocation3], 256, 64, 4
    $region5: #{tpu_custom_call.1} parent=1 // pred_fallthru
      _
    // Predicated region
    $region6: #{tpu_custom_call.1} parent=1 // pred_check
      _
    $region7: #{tpu_custom_call.1} parent=1 // pred_check_branch
      %29 = sbr.rel (0) target = $region9
    $region8: #{tpu_custom_call.1} parent=1 // pred_region
      %s30 = sadd.s32 0, 1
      %s31 = smul.u32 2, %s30
      %s33 = ssub.s32 256, 64
      %34 = vsyncadd [#allocation6], %s33
      %s35 = smul.addr %s31, 32
      %s36 = scalar_lea.hbm %s1, %s35
      %s37 = sshll.u32 [#allocation5], 4
      %s38 = int_to_ptr.vmem [resolvable:$true] %s37
      %43 = dma.hbm_to_vmem [thread:$0]  %s36, 64, %s38, [#allocation6], 256, 64, 4
    $region9: #{tpu_custom_call.1} parent=1 // pred_fallthru
      _
    // Predicated region
    $region10: #{tpu_custom_call.1} parent=1 // pred_check
      _
    $region11: #{tpu_custom_call.1} parent=1 // pred_check_branch
      %45 = sbr.rel (0) target = $region13
    $region12: #{tpu_custom_call.1} parent=1 // pred_region
      %s46 = sadd.s32 0, 2
      %s47 = smul.u32 2, %s46
      %s49 = ssub.s32 256, 64
      %50 = vsyncadd [#allocation6], %s49
      %s51 = smul.addr %s47, 32
      %s52 = scalar_lea.hbm %s2, %s51
      %s53 = sshll.u32 [#allocation7], 4
      %s54 = int_to_ptr.vmem [resolvable:$true] %s53
      %59 = dma.hbm_to_vmem [thread:$0]  %s52, 64, %s54, [#allocation6], 256, 64, 4
    $region13: #{tpu_custom_call.1} parent=1 // pred_fallthru
      _
    // Predicated region
    $region14: #{tpu_custom_call.1} parent=1 // pred_check
      _
    $region15: #{tpu_custom_call.1} parent=1 // pred_check_branch
      %61 = sbr.rel (0) target = $region17
    $region16: #{tpu_custom_call.1} parent=1 // pred_region
      %s62 = sadd.s32 0, 3
      %s63 = smul.u32 2, %s62
      %s65 = ssub.s32 256, 64
      %66 = vsyncadd [#allocation9], %s65
      %s67 = smul.addr %s63, 32
      %s68 = scalar_lea.hbm %s3, %s67
      %s69 = sshll.u32 [#allocation8], 4
      %s70 = int_to_ptr.vmem [resolvable:$true] %s69
      %75 = dma.hbm_to_vmem [thread:$0]  %s68, 64, %s70, [#allocation9], 256, 64, 4
    $region17: #{tpu_custom_call.1} parent=1 // pred_fallthru
      _
    // Predicated region
    $region18: #{tpu_custom_call.1} parent=1 // pred_check
      _
    $region19: #{tpu_custom_call.1} parent=1 // pred_check_branch
      %77 = sbr.rel (0) target = $region21
    $region20: #{tpu_custom_call.1} parent=1 // pred_region
      _
    $region21: #{tpu_custom_call.1} parent=1 // pred_fallthru
      _
    // Predicated region
    $region22: #{tpu_custom_call.1} parent=1 // pred_check
      _
    $region23: #{tpu_custom_call.1} parent=1 // pred_check_branch
      %79 = sbr.rel (0) target = $region25
    $region24: #{tpu_custom_call.1} parent=1 // pred_region
      %80 = dma.done [#allocation3], 256
    $region25: #{tpu_custom_call.1} parent=1 // pred_fallthru
      _
    // Predicated region
    $region26: #{tpu_custom_call.1} parent=1 // pred_check
      _
    $region27: #{tpu_custom_call.1} parent=1 // pred_check_branch
      %82 = sbr.rel (0) target = $region29
    $region28: #{tpu_custom_call.1} parent=1 // pred_region
      %83 = dma.done [#allocation6], 256
    $region29: #{tpu_custom_call.1} parent=1 // pred_fallthru
      _
    // Predicated region
    $region30: #{tpu_custom_call.1} parent=1 // pred_check
      _
    $region31: #{tpu_custom_call.1} parent=1 // pred_check_branch
      %85 = sbr.rel (0) target = $region33
    $region32: #{tpu_custom_call.1} parent=1 // pred_region
      %86 = dma.done [#allocation6], 256
    $region33: #{tpu_custom_call.1} parent=1 // pred_fallthru
      _
    // Predicated region
    $region34: #{tpu_custom_call.1} parent=1 // pred_check
      _
    $region35: #{tpu_custom_call.1} parent=1 // pred_check_branch
      %88 = sbr.rel (0) target = $region37
    $region36: #{tpu_custom_call.1} parent=1 // pred_region
      %89 = dma.done [#allocation9], 256
    $region37: #{tpu_custom_call.1} parent=1 // pred_fallthru
      _
    %s90 = sadd.s32 0, 1
    %s91 = smul.u32 2, %s90
    %s92 = sadd.s32 0, 2
    %s93 = smul.u32 2, %s92
    %s94 = sadd.s32 0, 3
    %s95 = smul.u32 2, %s94
    %v96 = vld [vmem:[#allocation2] sm:$0xf]
    %v97 = vld [vmem:[#allocation2 + $0x4] sm:$0xf]
    %v98 = vld [vmem:[#allocation2 + $0x8] sm:$0xf]
    %v99 = vld [vmem:[#allocation2 + $0xc] sm:$0xf]
    %v100 = vld [vmem:[#allocation5] sm:$0xf]
    %v101 = vld [vmem:[#allocation5 + $0x4] sm:$0xf]
    %v102 = vld [vmem:[#allocation5 + $0x8] sm:$0xf]
    %v103 = vld [vmem:[#allocation5 + $0xc] sm:$0xf]
    %v104 = vadd.f32 %v96, %v100
    %v105 = vadd.f32 %v97, %v101
    %v106 = vadd.f32 %v98, %v102
    %v107 = vadd.f32 %v99, %v103
    %v108 = vld [vmem:[#allocation7] sm:$0xf]
    %v109 = vld [vmem:[#allocation7 + $0x4] sm:$0xf]
    %v110 = vld [vmem:[#allocation7 + $0x8] sm:$0xf]
    %v111 = vld [vmem:[#allocation7 + $0xc] sm:$0xf]
    %v112 = vadd.f32 %v104, %v108
    %v113 = vadd.f32 %v105, %v109
    %v114 = vadd.f32 %v106, %v110
    %v115 = vadd.f32 %v107, %v111
    %v116 = vld [vmem:[#allocation8] sm:$0xf]
    %v117 = vld [vmem:[#allocation8 + $0x4] sm:$0xf]
    %v118 = vld [vmem:[#allocation8 + $0x8] sm:$0xf]
    %v119 = vld [vmem:[#allocation8 + $0xc] sm:$0xf]
    %v120 = vadd.f32 %v112, %v116
    %v121 = vadd.f32 %v113, %v117
    %v122 = vadd.f32 %v114, %v118
    %v123 = vadd.f32 %v115, %v119
    %124 = vst [vmem:[#allocation10] sm:$0xf] %v120
    %125 = vst [vmem:[#allocation10 + $0x4] sm:$0xf] %v121
    %126 = vst [vmem:[#allocation10 + $0x8] sm:$0xf] %v122
    %127 = vst [vmem:[#allocation10 + $0xc] sm:$0xf] %v123
    %p128 = scmp.eq.s32.totalorder 0, 0
    // Predicated region
    $region38: #{tpu_custom_call.1} parent=1 // pred_check
      %p129 = pneg %p128
    $region39: #{tpu_custom_call.1} parent=1 // pred_check_branch
      %131 = sbr.rel (%p129) target = $region41
    $region40: #{tpu_custom_call.1} parent=1 // pred_region
      %v132 = vld [vmem:[%s4] sm:$0xff]
      %vm133 = vcmask 7168
      %134 = vst.msk [vmem:[#allocation11] sm:$0xff] %vm133, %v132
    $region41: #{tpu_custom_call.1} parent=1 // pred_fallthru
      _
    // Predicated region
    $region42: #{tpu_custom_call.1} parent=1 // pred_check
      _
    $region43: #{tpu_custom_call.1} parent=1 // pred_check_branch
      %136 = sbr.rel (0) target = $region45
    $region44: #{tpu_custom_call.1} parent=1 // pred_region
      %s138 = ssub.s32 256, 64
      %139 = vsyncadd [#allocation4], %s138
      %s140 = sshll.u32 [#allocation10], 4
      %s141 = int_to_ptr.vmem [resolvable:$true] %s140
      %146 = dma.vmem_to_hbm [thread:$0]  %s141, 64, %s5, [#allocation4], 64, 64, 4
    $region45: #{tpu_custom_call.1} parent=1 // pred_fallthru
      _
    // Predicated region
    $region46: #{tpu_custom_call.1} parent=1 // pred_check
      _
    $region47: #{tpu_custom_call.1} parent=1 // pred_check_branch
      %148 = sbr.rel (0) target = $region49
    $region48: #{tpu_custom_call.1} parent=1 // pred_region
      // Predicated region
      $region50: #{tpu_custom_call.1} parent=48 // pred_check
        _
      $region51: #{tpu_custom_call.1} parent=48 // pred_check_branch
        %150 = sbr.rel (0) target = $region53
      $region52: #{tpu_custom_call.1} parent=48 // pred_region
        // Predicated region
        $region54: #{tpu_custom_call.1} parent=52 // pred_check
          _
        $region55: #{tpu_custom_call.1} parent=52 // pred_check_branch
          %152 = sbr.rel target = $region57
        $region56: #{tpu_custom_call.1} parent=52 // pred_region
          // Predicated region
          $region69: #{tpu_custom_call.1} parent=56 // pred_check
            _
          $region70: #{tpu_custom_call.1} parent=56 // pred_check_branch
            %167 = sbr.rel (0) target = $region72
          $region71: #{tpu_custom_call.1} parent=56 // pred_region
            loop: start=0, step=1, limit=1
            $region73: #{tpu_custom_call.1} parent=71 // loop_pre_header
              _
            $region74: #{tpu_custom_call.1} parent=71 // loop_header
              %s170 = sphi 0, %s174
              %p171 = scmp.ge.s32.totalorder %s170, 1
              %s175 = sphi [#allocation11], [#allocation11]
              %s176 = sphi %s6, %s6
            $region75: #{tpu_custom_call.1} parent=71 // loop_header_branch
              %173 = sbr.rel (%p171) target = $region79
            $region76: #{tpu_custom_call.1} parent=71 // loop_body
              %v177 = vld [vmem:[%s175] sm:$0x3]
              %178 = vst [vmem:[%s176] sm:$0x3] %v177
            $region77: #{tpu_custom_call.1} parent=71 // loop_footer
              %s174 = sadd.s32 1, %s170
            $region78: #{tpu_custom_call.1} parent=71 // loop_footer_branch
              %169 = sbr.rel target = $region74
            $region79: #{tpu_custom_call.1} parent=71 // loop_exit
              _
          $region72: #{tpu_custom_call.1} parent=56 // pred_fallthru
            _
        $region57: #{tpu_custom_call.1} parent=52 // pred_fallthru
          _
        // Predicated region
        $region58: #{tpu_custom_call.1} parent=52 // pred_check
          _
        $region59: #{tpu_custom_call.1} parent=52 // pred_check_branch
          %154 = sbr.rel (0) target = $region61
        $region60: #{tpu_custom_call.1} parent=52 // pred_region
          loop: start=0, step=1, limit=1
          $region62: #{tpu_custom_call.1} parent=60 // loop_pre_header
            _
          $region63: #{tpu_custom_call.1} parent=60 // loop_header
            %s157 = sphi 0, %s161
            %p158 = scmp.ge.s32.totalorder %s157, 1
            %s162 = sphi [#allocation11], [#allocation11]
            %s163 = sphi %s6, %s6
          $region64: #{tpu_custom_call.1} parent=60 // loop_header_branch
            %160 = sbr.rel (%p158) target = $region68
          $region65: #{tpu_custom_call.1} parent=60 // loop_body
            %v164 = vld [vmem:[%s162] sm:$0x3]
            %165 = vst [vmem:[%s163] sm:$0x3] %v164
          $region66: #{tpu_custom_call.1} parent=60 // loop_footer
            %s161 = sadd.s32 1, %s157
          $region67: #{tpu_custom_call.1} parent=60 // loop_footer_branch
            %156 = sbr.rel target = $region63
          $region68: #{tpu_custom_call.1} parent=60 // loop_exit
            _
        $region61: #{tpu_custom_call.1} parent=52 // pred_fallthru
          _
      $region53: #{tpu_custom_call.1} parent=48 // pred_fallthru
        _
      %179 = vnop
    $region49: #{tpu_custom_call.1} parent=1 // pred_fallthru
      _
    // Predicated region
    $region80: #{tpu_custom_call.1} parent=1 // pred_check
      _
    $region81: #{tpu_custom_call.1} parent=1 // pred_check_branch
      %181 = sbr.rel (0) target = $region83
    $region82: #{tpu_custom_call.1} parent=1 // pred_region
      %182 = dma.done [#allocation4], 256
    $region83: #{tpu_custom_call.1} parent=1 // pred_fallthru
      _
    // Predicated region
    $region84: #{tpu_custom_call.1} parent=1 // pred_check
      _
    $region85: #{tpu_custom_call.1} parent=1 // pred_check_branch
      %184 = sbr.rel (0) target = $region87
    $region86: #{tpu_custom_call.1} parent=1 // pred_region
      _
    $region87: #{tpu_custom_call.1} parent=1 // pred_fallthru
      _
    %185 = vsyncpa [#allocation3], 1
    %186 = vsyncpa [#allocation6], 1
    %187 = vsyncpa [#allocation9], 1
    %188 = vsyncpa [#allocation4], 1

</llo_original>
